<compile_context>
chip_gen: v7x
topology: tpu7x:2x2x1
jax: 0.10.0
libtpu: 0.0.40
codegen_flags: <defaults>
</compile_context>

<pallas_src>
import jax
import jax.numpy as jnp
from jax.experimental import pallas as pl
from jax.experimental.pallas import tpu as pltpu


def _round_up(x, m):
    return ((x + m - 1) // m) * m


# ---------------------------------------------------------------------------
# Parameter packing: 6 tensors -> 2 padded VMEM-friendly slabs.
#   weight slab (compute dtype):
#     rows [r1, r1+in)   cols [0, h1)   = W1   (in, h1)
#     rows [r2, r2+h1)   cols [0, h2)   = W2   (h1, h2)
#     rows [r3, r3+h2)   cols [0, out)  = W3   (h2, out)  (zero-padded to 128 cols)
#   bias slab (f32, shape (8, CPAD)):
#     row 0 = b1, row 1 = b2, row 2 = b3 (zero-padded)
# Row blocks are padded to multiples of 16 so static slices stay friendly for
# both f32 (8-row) and bf16 (16-row packed) sublane tiling.
# In a real training loop, pack once per parameter update (hoist out of the step).
# ---------------------------------------------------------------------------
def pack_critic_params(params, compute_dtype=jnp.bfloat16):
    w1, b1, w2, b2, w3, b3 = (params["w1"], params["b1"], params["w2"],
                              params["b2"], params["w3"], params["b3"])
    in_sz, h1 = w1.shape
    _, h2 = w2.shape
    _, out_sz = w3.shape

    out_pad = _round_up(out_sz, 128)                 # lane-dense output columns
    cpad = _round_up(max(h1, h2, out_pad), 128)

    rpad = 16
    r1 = 0
    r2 = r1 + _round_up(in_sz, rpad)
    r3 = r2 + _round_up(h1, rpad)
    rtot = r3 + _round_up(h2, rpad)

    w_slab = jnp.zeros((rtot, cpad), compute_dtype)
    w_slab = w_slab.at[r1:r1 + in_sz, :h1].set(w1.astype(compute_dtype))
    w_slab = w_slab.at[r2:r2 + h1, :h2].set(w2.astype(compute_dtype))
    w_slab = w_slab.at[r3:r3 + h2, :out_sz].set(w3.astype(compute_dtype))

    b_slab = jnp.zeros((8, cpad), jnp.float32)       # biases stay f32
    b_slab = b_slab.at[0, :h1].set(b1.reshape(-1))
    b_slab = b_slab.at[1, :h2].set(b2.reshape(-1))
    b_slab = b_slab.at[2, :out_sz].set(b3.reshape(-1))

    meta = dict(in_sz=in_sz, h1=h1, h2=h2, out_sz=out_sz, out_pad=out_pad,
                row_off=(r1, r2, r3))
    return w_slab, b_slab, meta


def _make_critic_kernel(in_sz, h1, h2, out_pad, row_off):
    r1, r2, r3 = row_off

    def kernel(x_ref, w_ref, b_ref, out_ref):
        x = x_ref[...]                                            # (TILE_B, in)
        cdt = w_ref.dtype

        w1 = w_ref[pl.ds(r1, in_sz), pl.ds(0, h1)]
        w2 = w_ref[pl.ds(r2, h1), pl.ds(0, h2)]
        w3 = w_ref[pl.ds(r3, h2), pl.ds(0, out_pad)]
        b1 = b_ref[pl.ds(0, 1), pl.ds(0, h1)]
        b2 = b_ref[pl.ds(1, 1), pl.ds(0, h2)]
        b3 = b_ref[pl.ds(2, 1), pl.ds(0, out_pad)]

        # linear1 + relu  (MXU in compute dtype, f32 accumulate, f32 VPU ops)
        a1 = jnp.dot(x, w1, preferred_element_type=jnp.float32)
        a1 = jnp.maximum(a1 + b1, 0.0)

        # linear2 + relu
        a2 = jnp.dot(a1.astype(cdt), w2, preferred_element_type=jnp.float32)
        a2 = jnp.maximum(a2 + b2, 0.0)

        # linear3 (no activation); padded columns are exactly zero
        v = jnp.dot(a2.astype(cdt), w3, preferred_element_type=jnp.float32)
        out_ref[...] = (v + b3).astype(out_ref.dtype)

    return kernel


def critic_forward(state, params, *, compute_dtype=jnp.float32, tile_b=512):
    """state: (B, num_states + num_actions) float32 -> (B, output_size) float32."""
    w_slab, b_slab, meta = pack_critic_params(params, compute_dtype)
    in_sz = meta["in_sz"]
    out_sz, out_pad = meta["out_sz"], meta["out_pad"]

    B = state.shape[0]
    # Pad the batch to a multiple of the tile (16-row multiples keep both f32
    # and bf16 sublane tiling happy).
    if B >= tile_b:
        b_pad = _round_up(B, tile_b)
        tb = tile_b
    else:
        b_pad = _round_up(B, 16)
        tb = b_pad

    x = state.astype(compute_dtype)
    if b_pad != B:
        x = jnp.pad(x, ((0, b_pad - B), (0, 0)))

    grid = (b_pad // tb,)
    kernel = _make_critic_kernel(in_sz, meta["h1"], meta["h2"], out_pad,
                                 meta["row_off"])

    out = pl.pallas_call(
        kernel,
        out_shape=jax.ShapeDtypeStruct((b_pad, out_pad), jnp.float32),
        grid_spec=pltpu.PrefetchScalarGridSpec(
            num_scalar_prefetch=0,
            grid=grid,
            in_specs=[
                # batch-tiled activations (pipelined)
                pl.BlockSpec((tb, in_sz), lambda i: (i, 0)),
                # parameter slabs: constant index map -> DMA'd once, VMEM-resident
                pl.BlockSpec(w_slab.shape, lambda i: (0, 0)),
                pl.BlockSpec(b_slab.shape, lambda i: (0, 0)),
            ],
            out_specs=pl.BlockSpec((tb, out_pad), lambda i: (i, 0)),
        ),
        compiler_params=pltpu.CompilerParams(
            # batch tiles are independent -> megacore sharding on v7x
            dimension_semantics=("parallel",),
        ),
    )(x, w_slab, b_slab)

    return out[:B, :out_sz]


def init_critic_params(key, num_states, num_actions, h1, h2, out_size):
    """Deterministic PyTorch-style (uniform +-1/sqrt(fan_in)) init."""
    input_size = num_states + num_actions

    def linear(key, fan_in, fan_out):
        kw, kb = jax.random.split(key)
        bound = 1.0 / jnp.sqrt(jnp.float32(fan_in))
        w = jax.random.uniform(kw, (fan_in, fan_out), jnp.float32, -bound, bound)
        b = jax.random.uniform(kb, (1, fan_out), jnp.float32, -bound, bound)
        return w, b

    k1, k2, k3 = jax.random.split(key, 3)
    w1, b1 = linear(k1, input_size, h1)
    w2, b2 = linear(k2, h1, h2)
    w3, b3 = linear(k3, h2, out_size)
    return {"w1": w1, "b1": b1, "w2": w2, "b2": b2, "w3": w3, "b3": b3}


def _reference_forward(state, p):
    h1 = jnp.maximum(state @ p["w1"] + p["b1"], 0.0)
    h2 = jnp.maximum(h1 @ p["w2"] + p["b2"], 0.0)
    return h2 @ p["w3"] + p["b3"]


if __name__ == "__main__":
    # Small shapes consistent with the module's forward.
    num_states, num_actions = 6, 2          # input_size = 8
    hiddenl1_size, hiddenl2_size = 32, 32
    output_size = 1
    batch = 8

    key = jax.random.PRNGKey(0)
    k_params, k_state = jax.random.split(key)

    params = init_critic_params(k_params, num_states, num_actions,
                                hiddenl1_size, hiddenl2_size, output_size)
    state = jax.random.normal(
        k_state, (batch, num_states + num_actions), jnp.float32)

    ref = _reference_forward(state, params)

    # f32 path: bit-faithful to the module's math (tight tolerance).
    v32 = jax.block_until_ready(
        critic_forward(state, params, compute_dtype=jnp.float32))
    assert v32.shape == (batch, output_size)
    assert jnp.allclose(v32, ref, atol=1e-5, rtol=1e-5)

    # bf16-operand path (f32 accumulation): perf mode, looser tolerance.
    vbf = jax.block_until_ready(
        critic_forward(state, params, compute_dtype=jnp.bfloat16))
    assert vbf.shape == (batch, output_size)
    assert jnp.allclose(vbf, ref, atol=3e-2, rtol=3e-2)

    print("KERNEL_OK")
</pallas_src>

<mosaic_0001>
module attributes {stable_mosaic.version = 11 : i64} {
  func.func @kernel(%arg0: i32, %arg1: memref<16x8xf32, #tpu.memory_space<vmem>>, %arg2: memref<80x128xf32, #tpu.memory_space<vmem>>, %arg3: memref<8x128xf32, #tpu.memory_space<vmem>>, %arg4: memref<16x128xf32, #tpu.memory_space<vmem>>) attributes {dimension_semantics = [#tpu.dimension_semantics<parallel>], iteration_bounds = array<i64: 1>, scalar_prefetch = 0 : i64, scratch_operands = 0 : i64, tpu.core_type = #tpu.core_type<tc>, window_params = [{transform_indices = @transform_0, window_bounds = array<i64: 16, 8>}, {pipeline_mode = #tpu.pipeline_mode<synchronous>, transform_indices = @transform_1, window_bounds = array<i64: 80, 128>}, {pipeline_mode = #tpu.pipeline_mode<synchronous>, transform_indices = @transform_2, window_bounds = array<i64: 8, 128>}, {transform_indices = @transform_3, window_bounds = array<i64: 16, 128>}]} {
    %c0 = arith.constant 0 : index
    %c0_0 = arith.constant 0 : index
    %0 = vector.load %arg1[%c0, %c0_0] : memref<16x8xf32, #tpu.memory_space<vmem>>, vector<16x8xf32>
    %c0_1 = arith.constant 0 : index
    %c0_2 = arith.constant 0 : index
    %1 = vector.load %arg2[%c0_1, %c0_2] : memref<80x128xf32, #tpu.memory_space<vmem>>, vector<8x32xf32>
    %c16 = arith.constant 16 : index
    %c0_3 = arith.constant 0 : index
    %2 = vector.load %arg2[%c16, %c0_3] : memref<80x128xf32, #tpu.memory_space<vmem>>, vector<32x32xf32>
    %c48 = arith.constant 48 : index
    %c0_4 = arith.constant 0 : index
    %3 = vector.load %arg2[%c48, %c0_4] : memref<80x128xf32, #tpu.memory_space<vmem>>, vector<32x128xf32>
    %c0_5 = arith.constant 0 : index
    %c0_6 = arith.constant 0 : index
    %4 = vector.load %arg3[%c0_5, %c0_6] : memref<8x128xf32, #tpu.memory_space<vmem>>, vector<1x32xf32>
    %c1 = arith.constant 1 : index
    %c0_7 = arith.constant 0 : index
    %5 = vector.load %arg3[%c1, %c0_7] : memref<8x128xf32, #tpu.memory_space<vmem>>, vector<1x32xf32>
    %c2 = arith.constant 2 : index
    %c0_8 = arith.constant 0 : index
    %6 = vector.load %arg3[%c2, %c0_8] : memref<8x128xf32, #tpu.memory_space<vmem>>, vector<1x128xf32>
    %cst = arith.constant dense<0.000000e+00> : vector<16x32xf32>
    %7 = tpu.matmul %0, %1, %cst {dimension_numbers = #tpu.dot_dimension_numbers<[1], [0], [0], [1], [0, 0, 1, 1], [], []>} : vector<16x8xf32>, vector<8x32xf32>, vector<16x32xf32> -> vector<16x32xf32>
    %8 = vector.broadcast %4 : vector<1x32xf32> to vector<16x32xf32>
    %9 = arith.addf %7, %8 : vector<16x32xf32>
    %cst_9 = arith.constant 0.000000e+00 : f32
    %10 = vector.broadcast %cst_9 : f32 to vector<16x32xf32>
    %11 = arith.maximumf %9, %10 : vector<16x32xf32>
    %cst_10 = arith.constant dense<0.000000e+00> : vector<16x32xf32>
    %12 = tpu.matmul %11, %2, %cst_10 {dimension_numbers = #tpu.dot_dimension_numbers<[1], [0], [0], [1], [0, 0, 1, 1], [], []>} : vector<16x32xf32>, vector<32x32xf32>, vector<16x32xf32> -> vector<16x32xf32>
    %13 = vector.broadcast %5 : vector<1x32xf32> to vector<16x32xf32>
    %14 = arith.addf %12, %13 : vector<16x32xf32>
    %cst_11 = arith.constant 0.000000e+00 : f32
    %15 = vector.broadcast %cst_11 : f32 to vector<16x32xf32>
    %16 = arith.maximumf %14, %15 : vector<16x32xf32>
    %cst_12 = arith.constant dense<0.000000e+00> : vector<16x128xf32>
    %17 = tpu.matmul %16, %3, %cst_12 {dimension_numbers = #tpu.dot_dimension_numbers<[1], [0], [0], [1], [0, 0, 1, 1], [], []>} : vector<16x32xf32>, vector<32x128xf32>, vector<16x128xf32> -> vector<16x128xf32>
    %18 = vector.broadcast %6 : vector<1x128xf32> to vector<16x128xf32>
    %19 = arith.addf %17, %18 : vector<16x128xf32>
    %c0_13 = arith.constant 0 : index
    %c0_14 = arith.constant 0 : index
    %20 = vector.load %arg4[%c0_13, %c0_14] : memref<16x128xf32, #tpu.memory_space<vmem>>, vector<16x128xf32>
    tpu.vector_store %arg4[%c0_13, %c0_14], %19 {strides = array<i32>} : memref<16x128xf32, #tpu.memory_space<vmem>>, vector<16x128xf32>,
    return
  }
  func.func @transform_0(%arg0: i32) -> (i32, i32) {
    %c0_i32 = arith.constant 0 : i32
    %c0_i32_0 = arith.constant 0 : i32
    return %arg0, %c0_i32 : i32, i32
  }
  func.func @transform_1(%arg0: i32) -> (i32, i32) {
    %c0_i32 = arith.constant 0 : i32
    %c0_i32_0 = arith.constant 0 : i32
    %c0_i32_1 = arith.constant 0 : i32
    return %c0_i32, %c0_i32_0 : i32, i32
  }
  func.func @transform_2(%arg0: i32) -> (i32, i32) {
    %c0_i32 = arith.constant 0 : i32
    %c0_i32_0 = arith.constant 0 : i32
    %c0_i32_1 = arith.constant 0 : i32
    return %c0_i32, %c0_i32_0 : i32, i32
  }
  func.func @transform_3(%arg0: i32) -> (i32, i32) {
    %c0_i32 = arith.constant 0 : i32
    %c0_i32_0 = arith.constant 0 : i32
    return %arg0, %c0_i32 : i32, i32
  }
}

</mosaic_0001>

<llo_original>
// kernel: tpu_custom_call.1
$region0: #{tpu_custom_call.1}
  #allocation0 [shape = 'u32[]', space=smem, size = 0x4, offset = 0x4, fixed_abs, tag = 'smem constant byte address 0x4 - core index']
  #allocation1 [shape = 'u32[144,128]{1,0:T(1,128)}', space=vmem, size = 0x12000, scoped, tag = 'internal scratch']
  %s0 = inlined_call_operand.vmem [shape: f32[16,8], index: 0, kind: input, shape index: {}]
  %s1 = inlined_call_operand.hbm [shape: f32[80,128], index: 1, kind: input, shape index: {}]
  %s2 = inlined_call_operand.vmem [shape: f32[8,128], index: 2, kind: input, shape index: {}]
  %s3 = inlined_call_operand.hbm [shape: f32[16,128], index: 3, kind: output, shape index: {}]
  %s4 = sld [smem:[#allocation0]]
  $region26: #{tpu_custom_call.1} parent=0
    _
  %s6 = ssub.s32 1, %s4
  %s7 = scalar_select 0, %s6, %s4
  $region1: #{tpu_custom_call.1} parent=0
    #allocation2 [shape = 'u8[40960]{0}', space=vmem, size = 0xa000, scoped, tag = 'input window, operand 1, single buffered']
    #allocation3 [shape = 's32[1]{0}', space=sflag, size = 0x4, scoped, tag = 'scoped memory for tpu_custom_call.1']
    #allocation4 [shape = 's32[1]{0}', space=sflag, size = 0x4, scoped, tag = 'scoped memory for tpu_custom_call.1']
    #allocation5 [shape = 'u8[8192]{0}', space=vmem, size = 0x2000, scoped, tag = 'output window, operand 0, single buffered']
    %8 = vsyncpa [#allocation3], 0
    %9 = vsyncpa [#allocation4], 0
    // Predicated region
    $region2: #{tpu_custom_call.1} parent=1 // pred_check
      _
    $region3: #{tpu_custom_call.1} parent=1 // pred_check_branch
      %11 = sbr.rel (0) target = $region5
    $region4: #{tpu_custom_call.1} parent=1 // pred_region
      _
    $region5: #{tpu_custom_call.1} parent=1 // pred_fallthru
      _
    // Predicated region
    $region6: #{tpu_custom_call.1} parent=1 // pred_check
      _
    $region7: #{tpu_custom_call.1} parent=1 // pred_check_branch
      %13 = sbr.rel (0) target = $region9
    $region8: #{tpu_custom_call.1} parent=1 // pred_region
      %s15 = ssub.s32 1280, 1280
      %16 = vsyncadd [#allocation3], %s15
      %s17 = sshll.u32 [#allocation2], 4
      %s18 = int_to_ptr.vmem [resolvable:$true] %s17
      %23 = dma.hbm_to_vmem [thread:$0]  %s1, 1280, %s18, [#allocation3], 128, 128, 8
    $region9: #{tpu_custom_call.1} parent=1 // pred_fallthru
      _
    // Predicated region
    $region10: #{tpu_custom_call.1} parent=1 // pred_check
      _
    $region11: #{tpu_custom_call.1} parent=1 // pred_check_branch
      %25 = sbr.rel (0) target = $region13
    $region12: #{tpu_custom_call.1} parent=1 // pred_region
      _
    $region13: #{tpu_custom_call.1} parent=1 // pred_fallthru
      _
    // Predicated region
    $region14: #{tpu_custom_call.1} parent=1 // pred_check
      _
    $region15: #{tpu_custom_call.1} parent=1 // pred_check_branch
      %27 = sbr.rel (0) target = $region17
    $region16: #{tpu_custom_call.1} parent=1 // pred_region
      %28 = dma.done [#allocation3], 1280
    $region17: #{tpu_custom_call.1} parent=1 // pred_fallthru
      _
    %v29 = vld [vmem:[%s0] sm:$0xff]
    %v30 = vld [vmem:[%s0 + $0x8] sm:$0xff]
    %v31 = vld [vmem:[#allocation2] sm:$0xff]
    %v32 = vld [vmem:[#allocation2 + $0x10] sm:$0xff]
    %v33 = vld [vmem:[#allocation2 + $0x18] sm:$0xff]
    %v34 = vld [vmem:[#allocation2 + $0x20] sm:$0xff]
    %v35 = vld [vmem:[#allocation2 + $0x28] sm:$0xff]
    %v36 = vld [vmem:[#allocation2 + $0x30] sm:$0xff]
    %v37 = vld [vmem:[#allocation2 + $0x38] sm:$0xff]
    %v38 = vld [vmem:[#allocation2 + $0x40] sm:$0xff]
    %v39 = vld [vmem:[#allocation2 + $0x48] sm:$0xff]
    %v40 = vld [vmem:[%s2] sm:$0x1]
    %v41 = vld [vmem:[%s2 + $0x1] sm:$0x1]
    %v42 = vld [vmem:[%s2 + $0x2] sm:$0x1]
    %v43 = vlaneseq
    %v44 = vshrl.u32 %v43, 7
    %v45 = vsub.s32 0, %v44
    %v46 = vrot.slane %v40, %v45
    %vm47 = vcmask 64512
    %v49 = vsel %vm47, %v29, 0
    %v52 = vsel %vm47, %v30, 0
    %54 = vmatprep.subr.mxu0 0.0
    %55 = vmatpush1.msra.mxu0 %v31
    %56 = vmatprep.subr.mxu0 0.0
    %57 = vmatpush1.msra.mxu0 0.0
    %58 = vmatprep.subr.mxu0 0.0
    %59 = vmatpush1.msra.mxu0 0.0
    %60 = vmatprep.subr.mxu0 0.0
    %61 = vmatpush1.msra.mxu0 0.0
    %62 = vmatprep.subr.mxu0 0.0
    %63 = vmatpush1.msra.mxu0 0.0
    %64 = vmatprep.subr.mxu0 0.0
    %65 = vmatpush1.msra.mxu0 0.0
    %66 = vmatprep.subr.mxu0 0.0
    %67 = vmatpush1.msra.mxu0 0.0
    %68 = vmatprep.subr.mxu0 0.0
    %69 = vmatpush1.msra.mxu0 0.0
    %70 = vmatprep.subr.mxu0 0.0
    %71 = vmatpush1.msra.mxu0 0.0
    %72 = vmatprep.subr.mxu0 0.0
    %73 = vmatpush1.msra.mxu0 0.0
    %74 = vmatprep.subr.mxu0 0.0
    %75 = vmatpush1.msra.mxu0 0.0
    %76 = vmatprep.subr.mxu0 0.0
    %77 = vmatpush1.msra.mxu0 0.0
    %78 = vmatprep.subr.mxu0 0.0
    %79 = vmatpush1.msra.mxu0 0.0
    %80 = vmatprep.subr.mxu0 0.0
    %81 = vmatpush1.msra.mxu0 0.0
    %82 = vmatprep.subr.mxu0 0.0
    %83 = vmatpush1.msra.mxu0 0.0
    %84 = vmatprep.subr.mxu0 0.0
    %85 = vmatpush1.msra.mxu0 0.0
    %86 = vmatprep.subr.mxu0 0.0
    %87 = vmatpush1.msra.mxu0 0.0
    %88 = vmatprep.subr.mxu0 0.0
    %89 = vmatpush1.msra.mxu0 0.0
    %90 = vmatprep.subr.mxu0 0.0
    %91 = vmatpush1.msra.mxu0 0.0
    %92 = vmatprep.subr.mxu0 0.0
    %93 = vmatpush1.msra.mxu0 0.0
    %94 = vmatprep.subr.mxu0 0.0
    %95 = vmatpush1.msra.mxu0 0.0
    %96 = vmatprep.subr.mxu0 0.0
    %97 = vmatpush1.msra.mxu0 0.0
    %98 = vmatprep.subr.mxu0 0.0
    %99 = vmatpush1.msra.mxu0 0.0
    %100 = vmatprep.subr.mxu0 0.0
    %101 = vmatpush1.msra.mxu0 0.0
    %102 = vmatprep.subr.mxu0 0.0
    %103 = vmatpush1.msra.mxu0 0.0
    %104 = vmatprep.subr.mxu0 0.0
    %105 = vmatpush1.msra.mxu0 0.0
    %106 = vmatprep.subr.mxu0 0.0
    %107 = vmatpush1.msra.mxu0 0.0
    %108 = vmatprep.subr.mxu0 0.0
    %109 = vmatpush1.msra.mxu0 0.0
    %110 = vmatprep.subr.mxu0 0.0
    %111 = vmatpush1.msra.mxu0 0.0
    %112 = vmatprep.subr.mxu0 0.0
    %113 = vmatpush1.msra.mxu0 0.0
    %114 = vmatprep.subr.mxu0 0.0
    %115 = vmatpush1.msra.mxu0 0.0
    %116 = vmatprep.subr.mxu0 0.0
    %117 = vmatpush1.msra.mxu0 0.0
    %118 = vmatprep.mubr.f32.mxu0 0.0
    %119 = vmatmul.mubr.f32.gmra.mrb[0].mxu0 %v49
    %v120 = vpop.f32.mrb[0].mxu0
    %v121 = vadd.f32 %v46, %v120
    %v122 = vpop.f32.mrb[0].mxu0
    %123 = vmatprep.mubr.f32.mxu0 0.0
    %124 = vmatmul.mubr.f32.gmra.mrb[0].mxu0 %v52
    %v125 = vpop.f32.mrb[0].mxu0
    %v126 = vadd.f32 %v46, %v125
    %v127 = vpop.f32.mrb[0].mxu0
    %128 = vdwg.mxu0
    %v129 = vmax.f32 %v121, 0.0
    %v130 = vmax.f32 %v126, 0.0
    %v131 = vlaneseq
    %v132 = vshrl.u32 %v131, 7
    %v133 = vsub.s32 0, %v132
    %v134 = vrot.slane %v41, %v133
    %vm135 = vcmask 261120
    %v137 = vsel %vm135, %v129, 0
    %v140 = vsel %vm135, %v130, 0
    %142 = vmatprep.subr.mxu0 0.0
    %143 = vmatpush1.msra.mxu0 %v32
    %144 = vmatprep.subr.mxu0 0.0
    %145 = vmatpush1.msra.mxu0 %v33
    %146 = vmatprep.subr.mxu0 0.0
    %147 = vmatpush1.msra.mxu0 %v34
    %148 = vmatprep.subr.mxu0 0.0
    %149 = vmatpush1.msra.mxu0 %v35
    %150 = vmatprep.subr.mxu0 0.0
    %151 = vmatpush1.msra.mxu0 0.0
    %152 = vmatprep.subr.mxu0 0.0
    %153 = vmatpush1.msra.mxu0 0.0
    %154 = vmatprep.subr.mxu0 0.0
    %155 = vmatpush1.msra.mxu0 0.0
    %156 = vmatprep.subr.mxu0 0.0
    %157 = vmatpush1.msra.mxu0 0.0
    %158 = vmatprep.subr.mxu0 0.0
    %159 = vmatpush1.msra.mxu0 0.0
    %160 = vmatprep.subr.mxu0 0.0
    %161 = vmatpush1.msra.mxu0 0.0
    %162 = vmatprep.subr.mxu0 0.0
    %163 = vmatpush1.msra.mxu0 0.0
    %164 = vmatprep.subr.mxu0 0.0
    %165 = vmatpush1.msra.mxu0 0.0
    %166 = vmatprep.subr.mxu0 0.0
    %167 = vmatpush1.msra.mxu0 0.0
    %168 = vmatprep.subr.mxu0 0.0
    %169 = vmatpush1.msra.mxu0 0.0
    %170 = vmatprep.subr.mxu0 0.0
    %171 = vmatpush1.msra.mxu0 0.0
    %172 = vmatprep.subr.mxu0 0.0
    %173 = vmatpush1.msra.mxu0 0.0
    %174 = vmatprep.subr.mxu0 0.0
    %175 = vmatpush1.msra.mxu0 0.0
    %176 = vmatprep.subr.mxu0 0.0
    %177 = vmatpush1.msra.mxu0 0.0
    %178 = vmatprep.subr.mxu0 0.0
    %179 = vmatpush1.msra.mxu0 0.0
    %180 = vmatprep.subr.mxu0 0.0
    %181 = vmatpush1.msra.mxu0 0.0
    %182 = vmatprep.subr.mxu0 0.0
    %183 = vmatpush1.msra.mxu0 0.0
    %184 = vmatprep.subr.mxu0 0.0
    %185 = vmatpush1.msra.mxu0 0.0
    %186 = vmatprep.subr.mxu0 0.0
    %187 = vmatpush1.msra.mxu0 0.0
    %188 = vmatprep.subr.mxu0 0.0
    %189 = vmatpush1.msra.mxu0 0.0
    %190 = vmatprep.subr.mxu0 0.0
    %191 = vmatpush1.msra.mxu0 0.0
    %192 = vmatprep.subr.mxu0 0.0
    %193 = vmatpush1.msra.mxu0 0.0
    %194 = vmatprep.subr.mxu0 0.0
    %195 = vmatpush1.msra.mxu0 0.0
    %196 = vmatprep.subr.mxu0 0.0
    %197 = vmatpush1.msra.mxu0 0.0
    %198 = vmatprep.subr.mxu0 0.0
    %199 = vmatpush1.msra.mxu0 0.0
    %200 = vmatprep.subr.mxu0 0.0
    %201 = vmatpush1.msra.mxu0 0.0
    %202 = vmatprep.subr.mxu0 0.0
    %203 = vmatpush1.msra.mxu0 0.0
    %204 = vmatprep.subr.mxu0 0.0
    %205 = vmatpush1.msra.mxu0 0.0
    %206 = vmatprep.mubr.f32.mxu0 0.0
    %207 = vmatmul.mubr.f32.gmra.mrb[0].mxu0 %v137
    %v208 = vpop.f32.mrb[0].mxu0
    %v209 = vadd.f32 %v134, %v208
    %v210 = vpop.f32.mrb[0].mxu0
    %211 = vmatprep.mubr.f32.mxu0 0.0
    %212 = vmatmul.mubr.f32.gmra.mrb[0].mxu0 %v140
    %v213 = vpop.f32.mrb[0].mxu0
    %v214 = vadd.f32 %v134, %v213
    %v215 = vpop.f32.mrb[0].mxu0
    %216 = vdwg.mxu0
    %v217 = vmax.f32 %v209, 0.0
    %v218 = vmax.f32 %v214, 0.0
    %v219 = vlaneseq
    %v220 = vshrl.u32 %v219, 7
    %v221 = vsub.s32 0, %v220
    %v222 = vrot.slane %v42, %v221
    %v224 = vsel %vm135, %v217, 0
    %v227 = vsel %vm135, %v218, 0
    %229 = vmatprep.subr.mxu0 0.0
    %230 = vmatpush1.msra.mxu0 %v36
    %231 = vmatprep.subr.mxu0 0.0
    %232 = vmatpush1.msra.mxu0 %v37
    %233 = vmatprep.subr.mxu0 0.0
    %234 = vmatpush1.msra.mxu0 %v38
    %235 = vmatprep.subr.mxu0 0.0
    %236 = vmatpush1.msra.mxu0 %v39
    %237 = vmatprep.subr.mxu0 0.0
    %238 = vmatpush1.msra.mxu0 0.0
    %239 = vmatprep.subr.mxu0 0.0
    %240 = vmatpush1.msra.mxu0 0.0
    %241 = vmatprep.subr.mxu0 0.0
    %242 = vmatpush1.msra.mxu0 0.0
    %243 = vmatprep.subr.mxu0 0.0
    %244 = vmatpush1.msra.mxu0 0.0
    %245 = vmatprep.subr.mxu0 0.0
    %246 = vmatpush1.msra.mxu0 0.0
    %247 = vmatprep.subr.mxu0 0.0
    %248 = vmatpush1.msra.mxu0 0.0
    %249 = vmatprep.subr.mxu0 0.0
    %250 = vmatpush1.msra.mxu0 0.0
    %251 = vmatprep.subr.mxu0 0.0
    %252 = vmatpush1.msra.mxu0 0.0
    %253 = vmatprep.subr.mxu0 0.0
    %254 = vmatpush1.msra.mxu0 0.0
    %255 = vmatprep.subr.mxu0 0.0
    %256 = vmatpush1.msra.mxu0 0.0
    %257 = vmatprep.subr.mxu0 0.0
    %258 = vmatpush1.msra.mxu0 0.0
    %259 = vmatprep.subr.mxu0 0.0
    %260 = vmatpush1.msra.mxu0 0.0
    %261 = vmatprep.subr.mxu0 0.0
    %262 = vmatpush1.msra.mxu0 0.0
    %263 = vmatprep.subr.mxu0 0.0
    %264 = vmatpush1.msra.mxu0 0.0
    %265 = vmatprep.subr.mxu0 0.0
    %266 = vmatpush1.msra.mxu0 0.0
    %267 = vmatprep.subr.mxu0 0.0
    %268 = vmatpush1.msra.mxu0 0.0
    %269 = vmatprep.subr.mxu0 0.0
    %270 = vmatpush1.msra.mxu0 0.0
    %271 = vmatprep.subr.mxu0 0.0
    %272 = vmatpush1.msra.mxu0 0.0
    %273 = vmatprep.subr.mxu0 0.0
    %274 = vmatpush1.msra.mxu0 0.0
    %275 = vmatprep.subr.mxu0 0.0
    %276 = vmatpush1.msra.mxu0 0.0
    %277 = vmatprep.subr.mxu0 0.0
    %278 = vmatpush1.msra.mxu0 0.0
    %279 = vmatprep.subr.mxu0 0.0
    %280 = vmatpush1.msra.mxu0 0.0
    %281 = vmatprep.subr.mxu0 0.0
    %282 = vmatpush1.msra.mxu0 0.0
    %283 = vmatprep.subr.mxu0 0.0
    %284 = vmatpush1.msra.mxu0 0.0
    %285 = vmatprep.subr.mxu0 0.0
    %286 = vmatpush1.msra.mxu0 0.0
    %287 = vmatprep.subr.mxu0 0.0
    %288 = vmatpush1.msra.mxu0 0.0
    %289 = vmatprep.subr.mxu0 0.0
    %290 = vmatpush1.msra.mxu0 0.0
    %291 = vmatprep.subr.mxu0 0.0
    %292 = vmatpush1.msra.mxu0 0.0
    %293 = vmatprep.mubr.f32.mxu0 0.0
    %294 = vmatmul.mubr.f32.gmra.mrb[0].mxu0 %v224
    %v295 = vpop.f32.mrb[0].mxu0
    %v296 = vadd.f32 %v222, %v295
    %v297 = vpop.f32.mrb[0].mxu0
    %298 = vmatprep.mubr.f32.mxu0 0.0
    %299 = vmatmul.mubr.f32.gmra.mrb[0].mxu0 %v227
    %v300 = vpop.f32.mrb[0].mxu0
    %v301 = vadd.f32 %v222, %v300
    %v302 = vpop.f32.mrb[0].mxu0
    %303 = vdwg.mxu0
    %304 = vst [vmem:[#allocation5] sm:$0xff] %v296
    %305 = vst [vmem:[#allocation5 + $0x8] sm:$0xff] %v301
    // Predicated region
    $region18: #{tpu_custom_call.1} parent=1 // pred_check
      _
    $region19: #{tpu_custom_call.1} parent=1 // pred_check_branch
      %307 = sbr.rel (0) target = $region21
    $region20: #{tpu_custom_call.1} parent=1 // pred_region
      %s309 = ssub.s32 256, 256
      %310 = vsyncadd [#allocation4], %s309
      %s311 = sshll.u32 [#allocation5], 4
      %s312 = int_to_ptr.vmem [resolvable:$true] %s311
      %317 = dma.vmem_to_hbm [thread:$0]  %s312, 256, %s3, [#allocation4], 128, 128, 8
    $region21: #{tpu_custom_call.1} parent=1 // pred_fallthru
      _
    // Predicated region
    $region22: #{tpu_custom_call.1} parent=1 // pred_check
      _
    $region23: #{tpu_custom_call.1} parent=1 // pred_check_branch
      %319 = sbr.rel (0) target = $region25
    $region24: #{tpu_custom_call.1} parent=1 // pred_region
      %320 = dma.done [#allocation4], 256
    $region25: #{tpu_custom_call.1} parent=1 // pred_fallthru
      _
    %321 = vsyncpa [#allocation3], 1
    %322 = vsyncpa [#allocation4], 1

</llo_original>
